<compile_context>
chip_gen: v7x
topology: tpu7x:2x2x1
jax: 0.10.0
libtpu: 0.0.40
codegen_flags: <defaults>
</compile_context>

<pallas_src>
import functools

import jax
import jax.numpy as jnp
import numpy as np
from jax.experimental import pallas as pl
from jax.experimental.pallas import tpu as pltpu


# ------------------------------ Pallas kernel -------------------------------

def _gated_causal_conv_kernel(x_ref, wa_ref, wb_ref, ba_ref, bb_ref, o_ref,
                              *, K, tl):
    """Fused gated causal conv for one (batch, L-tile) grid cell.

    x_ref : (Lp, C)  bf16   full left-padded sequence of this batch element
    wa_ref: (K, C, C) bf16  conv_a weights, tap-major, (Cin, Cout) per tap
    wb_ref: (K, C, C) bf16  conv_b weights
    ba_ref: (1, C)   f32    conv_a bias
    bb_ref: (1, C)   f32    conv_b bias
    o_ref : (tl, C)  f32    gated output tile
    """
    i = pl.program_id(1)
    start = i * tl                       # offset into the padded length axis

    # One dynamic load of the halo'd window, then K static shifted views.
    window = x_ref[pl.ds(start, tl + K - 1), :]          # (tl + K - 1, C) bf16

    c_out = o_ref.shape[-1]
    acc_a = jnp.zeros((tl, c_out), jnp.float32)
    acc_b = jnp.zeros((tl, c_out), jnp.float32)
    for k in range(K):                                   # static unroll, K small
        xk = window[k:k + tl, :]                         # (tl, C) bf16
        acc_a = acc_a + jnp.dot(xk, wa_ref[k],
                                preferred_element_type=jnp.float32)
        acc_b = acc_b + jnp.dot(xk, wb_ref[k],
                                preferred_element_type=jnp.float32)

    h_a = acc_a + ba_ref[...]
    h_b = acc_b + bb_ref[...]
    o_ref[...] = (h_a * jax.nn.sigmoid(h_b)).astype(o_ref.dtype)


# ------------------------------ host wrappers --------------------------------

def _vmem_limit_bytes():
    """Generation-aware VMEM budget (stays inside v7x's 64 MiB physical)."""
    try:
        cap = pltpu.get_tpu_info().vmem_capacity_bytes
        return int(min(cap * 3 // 4, 96 << 20))
    except Exception:
        return 48 << 20   # safe default on every TPU generation


def _choose_tile(L):
    """Largest multiple-of-8 tile (<=512) that divides L, else full L."""
    if L <= 512:
        return L
    for t in range(512, 7, -8):
        if L % t == 0:
            return t
    # TODO(synk): masked tail tiles for long prime-length sequences.
    return L


def _gated_causal_conv(x_pad, wa, wb, ba, bb, *, L):
    """x_pad: (N, L+K-1, C) bf16; returns gated output (N, L, C) f32."""
    N, Lp, C = x_pad.shape
    K = wa.shape[0]
    tl = _choose_tile(L)
    grid = (N, L // tl)

    flops = 4 * N * L * K * C * C              # two convs, 2 flops / MAC
    transcendentals = N * L * C                # sigmoid
    bytes_accessed = (x_pad.size * 2 + (wa.size + wb.size) * 2
                      + (ba.size + bb.size) * 4 + N * L * C * 4)

    kern = functools.partial(_gated_causal_conv_kernel, K=K, tl=tl)
    return pl.pallas_call(
        kern,
        out_shape=jax.ShapeDtypeStruct((N, L, C), jnp.float32),
        grid=grid,
        in_specs=[
            # Full padded sequence of batch n, resident across the L-tile axis
            # (constant block index => no re-fetch between L tiles).
            pl.BlockSpec((None, Lp, C), lambda n, i: (n, 0, 0)),
            pl.BlockSpec((K, C, C), lambda n, i: (0, 0, 0)),   # conv_a weight
            pl.BlockSpec((K, C, C), lambda n, i: (0, 0, 0)),   # conv_b weight
            pl.BlockSpec((1, C), lambda n, i: (0, 0)),         # conv_a bias
            pl.BlockSpec((1, C), lambda n, i: (0, 0)),         # conv_b bias
        ],
        out_specs=pl.BlockSpec((None, tl, C), lambda n, i: (n, i, 0)),
        compiler_params=pltpu.CompilerParams(
            dimension_semantics=("parallel", "parallel"),
            vmem_limit_bytes=_vmem_limit_bytes()),
        cost_estimate=pl.CostEstimate(flops=flops,
                                      transcendentals=transcendentals,
                                      bytes_accessed=bytes_accessed),
    )(x_pad, wa, wb, ba, bb)


def causal_convolution_layer_forward(params, x_ncl):
    """x_ncl: (N, C, L) float32 (PyTorch Conv1d layout) -> (N, C, L) float32."""
    N, C, L = x_ncl.shape
    wa = params['wa']
    K = wa.shape[0]                      # static under jit (shape-derived)

    x_nlc = jnp.transpose(x_ncl, (0, 2, 1)).astype(jnp.float32)   # N, L, C
    x_pad = jnp.pad(x_nlc, ((0, 0), (K - 1, 0), (0, 0)))          # causal pad

    out_nlc = _gated_causal_conv(
        x_pad.astype(jnp.bfloat16),
        wa.astype(jnp.bfloat16),
        params['wb'].astype(jnp.bfloat16),
        params['ba'].astype(jnp.float32),
        params['bb'].astype(jnp.float32),
        L=L)
    return jnp.transpose(out_nlc, (0, 2, 1))                      # back to N,C,L


# --------------------------- parameter construction --------------------------

def make_causal_conv_layer_params(key, embedding_dim, kernel_size):
    """PyTorch-style uniform init; weights stored tap-major as (K, Cin, Cout)."""
    k0, k1, k2, k3 = jax.random.split(key, 4)
    fan_in = embedding_dim * kernel_size
    bound = float(1.0 / np.sqrt(fan_in))
    shape_w = (kernel_size, embedding_dim, embedding_dim)
    return dict(
        wa=jax.random.uniform(k0, shape_w, jnp.float32, -bound, bound),
        wb=jax.random.uniform(k1, shape_w, jnp.float32, -bound, bound),
        ba=jax.random.uniform(k2, (1, embedding_dim), jnp.float32, -bound, bound),
        bb=jax.random.uniform(k3, (1, embedding_dim), jnp.float32, -bound, bound),
    )


# ------------------------------ pure-JAX reference ---------------------------

def _reference_forward(params, x_ncl):
    N, C, L = x_ncl.shape
    K = params['wa'].shape[0]
    x_nlc = jnp.transpose(x_ncl, (0, 2, 1))
    x_pad = jnp.pad(x_nlc, ((0, 0), (K - 1, 0), (0, 0))).astype(jnp.bfloat16)
    wa = params['wa'].astype(jnp.bfloat16)
    wb = params['wb'].astype(jnp.bfloat16)

    def conv(w, b):
        acc = jnp.zeros((N, L, C), jnp.float32)
        for k in range(K):
            acc = acc + jnp.einsum('nlc,cd->nld', x_pad[:, k:k + L, :], w[k],
                                   preferred_element_type=jnp.float32)
        return acc + b

    h_a = conv(wa, params['ba'])
    h_b = conv(wb, params['bb'])
    return jnp.transpose(h_a * jax.nn.sigmoid(h_b), (0, 2, 1))


# ----------------------------------- main ------------------------------------

if __name__ == "__main__":
    EMBEDDING_DIM = 32
    KERNEL_SIZE = 3
    BATCH, SEQ = 2, 8

    root = jax.random.PRNGKey(0)
    k_params, k_x = jax.random.split(root)
    params = make_causal_conv_layer_params(k_params, EMBEDDING_DIM, KERNEL_SIZE)
    x = jax.random.normal(k_x, (BATCH, EMBEDDING_DIM, SEQ), jnp.float32)

    fwd = jax.jit(causal_convolution_layer_forward)
    out = jax.block_until_ready(fwd(params, x))

    assert out.shape == (BATCH, EMBEDDING_DIM, SEQ), out.shape
    assert out.dtype == jnp.float32
    assert bool(jnp.all(jnp.isfinite(out)))

    ref = jax.block_until_ready(_reference_forward(params, x))
    max_err = float(jnp.max(jnp.abs(out - ref)))
    assert max_err < 2e-2, f"max abs error vs reference: {max_err}"

    print("KERNEL_OK")
</pallas_src>

<mosaic_0001>
module attributes {stable_mosaic.version = 11 : i64} {
  func.func @_gated_causal_conv_kernel(%arg0: i32, %arg1: i32, %arg2: memref<1x10x32xbf16, #tpu.memory_space<vmem>>, %arg3: memref<3x32x32xbf16, #tpu.memory_space<vmem>>, %arg4: memref<3x32x32xbf16, #tpu.memory_space<vmem>>, %arg5: memref<1x32xf32, #tpu.memory_space<vmem>>, %arg6: memref<1x32xf32, #tpu.memory_space<vmem>>, %arg7: memref<1x8x32xf32, #tpu.memory_space<vmem>>) attributes {dimension_semantics = [#tpu.dimension_semantics<parallel>, #tpu.dimension_semantics<parallel>], iteration_bounds = array<i64: 2, 1>, scalar_prefetch = 0 : i64, scratch_operands = 0 : i64, tpu.core_type = #tpu.core_type<tc>, window_params = [{transform_indices = @transform_0, window_bounds = array<i64: 1, 10, 32>}, {pipeline_mode = #tpu.pipeline_mode<synchronous>, transform_indices = @transform_1, window_bounds = array<i64: 3, 32, 32>}, {pipeline_mode = #tpu.pipeline_mode<synchronous>, transform_indices = @transform_2, window_bounds = array<i64: 3, 32, 32>}, {pipeline_mode = #tpu.pipeline_mode<synchronous>, transform_indices = @transform_3, window_bounds = array<i64: 1, 32>}, {pipeline_mode = #tpu.pipeline_mode<synchronous>, transform_indices = @transform_4, window_bounds = array<i64: 1, 32>}, {transform_indices = @transform_5, window_bounds = array<i64: 1, 8, 32>}]} {
    %c8_i32 = arith.constant 8 : i32
    %0 = arith.muli %arg1, %c8_i32 : i32
    %c0 = arith.constant 0 : index
    %1 = arith.index_cast %0 : i32 to index
    %c0_0 = arith.constant 0 : index
    %2 = vector.load %arg2[%c0, %1, %c0_0] : memref<1x10x32xbf16, #tpu.memory_space<vmem>>, vector<1x10x32xbf16>
    %3 = vector.shape_cast %2 : vector<1x10x32xbf16> to vector<10x32xbf16>
    %cst = arith.constant 0.000000e+00 : f32
    %4 = vector.broadcast %cst : f32 to vector<8x32xf32>
    %cst_1 = arith.constant 0.000000e+00 : f32
    %5 = vector.broadcast %cst_1 : f32 to vector<8x32xf32>
    %6 = vector.extract_strided_slice %3 {offsets = [0, 0], sizes = [8, 32], strides = [1, 1]} : vector<10x32xbf16> to vector<8x32xbf16>
    %c0_2 = arith.constant 0 : index
    %c0_3 = arith.constant 0 : index
    %c0_4 = arith.constant 0 : index
    %7 = vector.load %arg3[%c0_2, %c0_3, %c0_4] : memref<3x32x32xbf16, #tpu.memory_space<vmem>>, vector<1x32x32xbf16>
    %8 = vector.shape_cast %7 : vector<1x32x32xbf16> to vector<32x32xbf16>
    %cst_5 = arith.constant dense<0.000000e+00> : vector<8x32xf32>
    %9 = tpu.matmul %6, %8, %cst_5 {dimension_numbers = #tpu.dot_dimension_numbers<[1], [0], [0], [1], [0, 0, 1, 1], [], []>} : vector<8x32xbf16>, vector<32x32xbf16>, vector<8x32xf32> -> vector<8x32xf32>
    %10 = arith.addf %4, %9 : vector<8x32xf32>
    %c0_6 = arith.constant 0 : index
    %c0_7 = arith.constant 0 : index
    %c0_8 = arith.constant 0 : index
    %11 = vector.load %arg4[%c0_6, %c0_7, %c0_8] : memref<3x32x32xbf16, #tpu.memory_space<vmem>>, vector<1x32x32xbf16>
    %12 = vector.shape_cast %11 : vector<1x32x32xbf16> to vector<32x32xbf16>
    %cst_9 = arith.constant dense<0.000000e+00> : vector<8x32xf32>
    %13 = tpu.matmul %6, %12, %cst_9 {dimension_numbers = #tpu.dot_dimension_numbers<[1], [0], [0], [1], [0, 0, 1, 1], [], []>} : vector<8x32xbf16>, vector<32x32xbf16>, vector<8x32xf32> -> vector<8x32xf32>
    %14 = arith.addf %5, %13 : vector<8x32xf32>
    %15 = vector.extract_strided_slice %3 {offsets = [1, 0], sizes = [8, 32], strides = [1, 1]} : vector<10x32xbf16> to vector<8x32xbf16>
    %c1 = arith.constant 1 : index
    %c0_10 = arith.constant 0 : index
    %c0_11 = arith.constant 0 : index
    %16 = vector.load %arg3[%c1, %c0_10, %c0_11] : memref<3x32x32xbf16, #tpu.memory_space<vmem>>, vector<1x32x32xbf16>
    %17 = vector.shape_cast %16 : vector<1x32x32xbf16> to vector<32x32xbf16>
    %cst_12 = arith.constant dense<0.000000e+00> : vector<8x32xf32>
    %18 = tpu.matmul %15, %17, %cst_12 {dimension_numbers = #tpu.dot_dimension_numbers<[1], [0], [0], [1], [0, 0, 1, 1], [], []>} : vector<8x32xbf16>, vector<32x32xbf16>, vector<8x32xf32> -> vector<8x32xf32>
    %19 = arith.addf %10, %18 : vector<8x32xf32>
    %c1_13 = arith.constant 1 : index
    %c0_14 = arith.constant 0 : index
    %c0_15 = arith.constant 0 : index
    %20 = vector.load %arg4[%c1_13, %c0_14, %c0_15] : memref<3x32x32xbf16, #tpu.memory_space<vmem>>, vector<1x32x32xbf16>
    %21 = vector.shape_cast %20 : vector<1x32x32xbf16> to vector<32x32xbf16>
    %cst_16 = arith.constant dense<0.000000e+00> : vector<8x32xf32>
    %22 = tpu.matmul %15, %21, %cst_16 {dimension_numbers = #tpu.dot_dimension_numbers<[1], [0], [0], [1], [0, 0, 1, 1], [], []>} : vector<8x32xbf16>, vector<32x32xbf16>, vector<8x32xf32> -> vector<8x32xf32>
    %23 = arith.addf %14, %22 : vector<8x32xf32>
    %24 = vector.extract_strided_slice %3 {offsets = [2, 0], sizes = [8, 32], strides = [1, 1]} : vector<10x32xbf16> to vector<8x32xbf16>
    %c2 = arith.constant 2 : index
    %c0_17 = arith.constant 0 : index
    %c0_18 = arith.constant 0 : index
    %25 = vector.load %arg3[%c2, %c0_17, %c0_18] : memref<3x32x32xbf16, #tpu.memory_space<vmem>>, vector<1x32x32xbf16>
    %26 = vector.shape_cast %25 : vector<1x32x32xbf16> to vector<32x32xbf16>
    %cst_19 = arith.constant dense<0.000000e+00> : vector<8x32xf32>
    %27 = tpu.matmul %24, %26, %cst_19 {dimension_numbers = #tpu.dot_dimension_numbers<[1], [0], [0], [1], [0, 0, 1, 1], [], []>} : vector<8x32xbf16>, vector<32x32xbf16>, vector<8x32xf32> -> vector<8x32xf32>
    %28 = arith.addf %19, %27 : vector<8x32xf32>
    %c2_20 = arith.constant 2 : index
    %c0_21 = arith.constant 0 : index
    %c0_22 = arith.constant 0 : index
    %29 = vector.load %arg4[%c2_20, %c0_21, %c0_22] : memref<3x32x32xbf16, #tpu.memory_space<vmem>>, vector<1x32x32xbf16>
    %30 = vector.shape_cast %29 : vector<1x32x32xbf16> to vector<32x32xbf16>
    %cst_23 = arith.constant dense<0.000000e+00> : vector<8x32xf32>
    %31 = tpu.matmul %24, %30, %cst_23 {dimension_numbers = #tpu.dot_dimension_numbers<[1], [0], [0], [1], [0, 0, 1, 1], [], []>} : vector<8x32xbf16>, vector<32x32xbf16>, vector<8x32xf32> -> vector<8x32xf32>
    %32 = arith.addf %23, %31 : vector<8x32xf32>
    %c0_24 = arith.constant 0 : index
    %c0_25 = arith.constant 0 : index
    %33 = vector.load %arg5[%c0_24, %c0_25] : memref<1x32xf32, #tpu.memory_space<vmem>>, vector<1x32xf32>
    %34 = vector.broadcast %33 : vector<1x32xf32> to vector<8x32xf32>
    %35 = arith.addf %28, %34 : vector<8x32xf32>
    %c0_26 = arith.constant 0 : index
    %c0_27 = arith.constant 0 : index
    %36 = vector.load %arg6[%c0_26, %c0_27] : memref<1x32xf32, #tpu.memory_space<vmem>>, vector<1x32xf32>
    %37 = vector.broadcast %36 : vector<1x32xf32> to vector<8x32xf32>
    %38 = arith.addf %32, %37 : vector<8x32xf32>
    %39 = arith.negf %38 : vector<8x32xf32>
    %40 = math.exp %39 : vector<8x32xf32>
    %cst_28 = arith.constant 1.000000e+00 : f32
    %41 = vector.broadcast %cst_28 : f32 to vector<8x32xf32>
    %42 = arith.addf %41, %40 : vector<8x32xf32>
    %43 = arith.divf %41, %42 : vector<8x32xf32>
    %44 = arith.mulf %35, %43 : vector<8x32xf32>
    %c0_29 = arith.constant 0 : index
    %c0_30 = arith.constant 0 : index
    %c0_31 = arith.constant 0 : index
    %45 = vector.load %arg7[%c0_29, %c0_30, %c0_31] : memref<1x8x32xf32, #tpu.memory_space<vmem>>, vector<1x8x32xf32>
    %46 = vector.shape_cast %45 : vector<1x8x32xf32> to vector<8x32xf32>
    %47 = vector.shape_cast %44 : vector<8x32xf32> to vector<1x8x32xf32>
    tpu.vector_store %arg7[%c0_29, %c0_30, %c0_31], %47 {strides = array<i32>} : memref<1x8x32xf32, #tpu.memory_space<vmem>>, vector<1x8x32xf32>,
    return
  }
  func.func @transform_0(%arg0: i32, %arg1: i32) -> (i32, i32, i32) {
    %c0_i32 = arith.constant 0 : i32
    %c0_i32_0 = arith.constant 0 : i32
    %c0_i32_1 = arith.constant 0 : i32
    return %arg0, %c0_i32, %c0_i32_0 : i32, i32, i32
  }
  func.func @transform_1(%arg0: i32, %arg1: i32) -> (i32, i32, i32) {
    %c0_i32 = arith.constant 0 : i32
    %c0_i32_0 = arith.constant 0 : i32
    %c0_i32_1 = arith.constant 0 : i32
    %c0_i32_2 = arith.constant 0 : i32
    return %c0_i32, %c0_i32_0, %c0_i32_1 : i32, i32, i32
  }
  func.func @transform_2(%arg0: i32, %arg1: i32) -> (i32, i32, i32) {
    %c0_i32 = arith.constant 0 : i32
    %c0_i32_0 = arith.constant 0 : i32
    %c0_i32_1 = arith.constant 0 : i32
    %c0_i32_2 = arith.constant 0 : i32
    return %c0_i32, %c0_i32_0, %c0_i32_1 : i32, i32, i32
  }
  func.func @transform_3(%arg0: i32, %arg1: i32) -> (i32, i32) {
    %c0_i32 = arith.constant 0 : i32
    %c0_i32_0 = arith.constant 0 : i32
    %c0_i32_1 = arith.constant 0 : i32
    return %c0_i32, %c0_i32_0 : i32, i32
  }
  func.func @transform_4(%arg0: i32, %arg1: i32) -> (i32, i32) {
    %c0_i32 = arith.constant 0 : i32
    %c0_i32_0 = arith.constant 0 : i32
    %c0_i32_1 = arith.constant 0 : i32
    return %c0_i32, %c0_i32_0 : i32, i32
  }
  func.func @transform_5(%arg0: i32, %arg1: i32) -> (i32, i32, i32) {
    %c0_i32 = arith.constant 0 : i32
    %c0_i32_0 = arith.constant 0 : i32
    return %arg0, %arg1, %c0_i32 : i32, i32, i32
  }
}

</mosaic_0001>

<llo_original>
// kernel: causal_convolution_layer_forward.1
$region0: #{causal_convolution_layer_forward.1}
  #allocation0 [shape = 'u32[]', space=smem, size = 0x4, offset = 0x4, fixed_abs, tag = 'smem constant byte address 0x4 - core index']
  #allocation1 [shape = 'u32[144,128]{1,0:T(1,128)}', space=vmem, size = 0x12000, scoped, tag = 'internal scratch']
  %s0 = inlined_call_operand.vmem [shape: bf16[2,10,32], index: 0, kind: input, shape index: {}]
  %s1 = inlined_call_operand.vmem [shape: bf16[3,32,32], index: 1, kind: input, shape index: {}]
  %s2 = inlined_call_operand.vmem [shape: bf16[3,32,32], index: 2, kind: input, shape index: {}]
  %s3 = inlined_call_operand.vmem [shape: f32[1,32], index: 3, kind: input, shape index: {}]
  %s4 = inlined_call_operand.vmem [shape: f32[1,32], index: 4, kind: input, shape index: {}]
  %s5 = inlined_call_operand.hbm [shape: f32[2,8,32], index: 5, kind: output, shape index: {}]
  %s6 = sld [smem:[#allocation0]]
  $region53: #{causal_convolution_layer_forward.1} parent=0
    _
  %s8 = ssub.s32 1, %s6
  %s9 = scalar_select 0, %s8, %s6
  $region1: #{causal_convolution_layer_forward.1} parent=0
    #allocation2 [shape = 'u8[8192]{0}', space=vmem, size = 0x2000, scoped, tag = 'output window, operand 0']
    #allocation3 [shape = 's32[2]{0}', space=sflag, size = 0x8, scoped, tag = 'scoped memory for causal_convolution_layer_forward.1']
    %10 = vsyncpa [#allocation3], 0
    %s11 = scalar_lea.sflag [#allocation3], 1
    %12 = vsyncpa %s11, 0
    loop: start=0, step=1, limit=4
    $region2: #{causal_convolution_layer_forward.1} parent=1 // loop_pre_header
      _
    $region3: #{causal_convolution_layer_forward.1} parent=1 // loop_header
      %s14 = sphi 0, %s18
      %p15 = scmp.ge.s32.totalorder %s14, 4
      %s21 = sphi 0, %s33
      %s22 = sphi 0, %s29
      %s23 = sphi 0, %s21
      %s24 = sphi 0, %s22
      %s25 = sphi 0, %s23
      %s26 = sphi 0, %s24
      %s36 = sphi 0, %s38
      %s39 = sphi 0, %s36
      %s40 = sphi 0, %s39
      %s56 = sphi 0, %s40
      %s60 = sphi 0, %s60
      %s62 = sphi 0, %s60
      %s63 = sphi 0, %s62
      %s77 = sphi 0, %s63
      %s81 = sphi 0, %s81
      %s83 = sphi 0, %s81
      %s84 = sphi 0, %s83
      %s98 = sphi 0, %s84
      %s102 = sphi 0, %s102
      %s104 = sphi 0, %s102
      %s105 = sphi 0, %s104
      %s119 = sphi 0, %s105
      %s123 = sphi 0, %s123
      %s125 = sphi 0, %s123
      %s126 = sphi 0, %s125
      %s140 = sphi 0, %s126
      %s148 = sphi 0, %s150
      %s151 = sphi 0, %s148
      %s152 = sphi 0, %s151
      %s168 = sphi 0, %s152
    $region4: #{causal_convolution_layer_forward.1} parent=1 // loop_header_branch
      %17 = sbr.rel (%p15) target = $region8
    $region5: #{causal_convolution_layer_forward.1} parent=1 // loop_body
      %s19 = ssub.s32 %s14, 1
      %s20 = ssub.s32 %s14, 2
      %s27 = sadd.s32 1, %s22
      %p28 = scmp.ge.s32.totalorder %s27, 1
      %s29 = scalar_select %p28, 0, %s27
      %s30 = sadd.s32 1, %s21
      %s31 = scalar_select %p28, %s30, %s21
      %p32 = scmp.ge.s32.totalorder %s31, 2
      %s33 = scalar_select %p32, 0, %s31
      %s34 = ssub.s32 %s21, %s33
      %p35 = scmp.eq.s32.totalorder %s34, 0
      %s37 = sadd.s32 %s36, 1
      %s38 = scalar_select %p35, %s36, %s37
      %p41 = pneg %p35
      %p42 = scmp.eq.s32.totalorder %s14, 1
      %p43 = por %p41, %p42
      %p44 = scmp.ne.s32.totalorder %s36, %s39
      %p45 = scmp.eq.s32.totalorder %s14, 0
      %p46 = por %p44, %p45
      %p47 = scmp.ne.s32.totalorder %s36, %s39
      %p48 = scmp.eq.s32.totalorder %s19, 1
      %p49 = por %p47, %p48
      %p50 = scmp.ne.s32.totalorder %s39, %s40
      %p51 = scmp.eq.s32.totalorder %s19, 0
      %p52 = por %p50, %p51
      %p53 = scmp.ne.s32.totalorder %s39, %s40
      %p54 = scmp.eq.s32.totalorder %s20, 1
      %p55 = por %p53, %p54
      %p57 = scmp.ne.s32.totalorder %s40, %s56
      %p58 = scmp.eq.s32.totalorder %s20, 0
      %p59 = por %p57, %p58
      %s61 = sadd.s32 %s60, 1
      %p64 = scmp.eq.s32.totalorder %s14, 1
      %p65 = scmp.ne.s32.totalorder %s60, %s62
      %p66 = scmp.eq.s32.totalorder %s14, 0
      %p67 = por %p65, %p66
      %p68 = scmp.ne.s32.totalorder %s60, %s62
      %p69 = scmp.eq.s32.totalorder %s19, 1
      %p70 = por %p68, %p69
      %p71 = scmp.ne.s32.totalorder %s62, %s63
      %p72 = scmp.eq.s32.totalorder %s19, 0
      %p73 = por %p71, %p72
      %p74 = scmp.ne.s32.totalorder %s62, %s63
      %p75 = scmp.eq.s32.totalorder %s20, 1
      %p76 = por %p74, %p75
      %p78 = scmp.ne.s32.totalorder %s63, %s77
      %p79 = scmp.eq.s32.totalorder %s20, 0
      %p80 = por %p78, %p79
      %s82 = sadd.s32 %s81, 1
      %p85 = scmp.eq.s32.totalorder %s14, 1
      %p86 = scmp.ne.s32.totalorder %s81, %s83
      %p87 = scmp.eq.s32.totalorder %s14, 0
      %p88 = por %p86, %p87
      %p89 = scmp.ne.s32.totalorder %s81, %s83
      %p90 = scmp.eq.s32.totalorder %s19, 1
      %p91 = por %p89, %p90
      %p92 = scmp.ne.s32.totalorder %s83, %s84
      %p93 = scmp.eq.s32.totalorder %s19, 0
      %p94 = por %p92, %p93
      %p95 = scmp.ne.s32.totalorder %s83, %s84
      %p96 = scmp.eq.s32.totalorder %s20, 1
      %p97 = por %p95, %p96
      %p99 = scmp.ne.s32.totalorder %s84, %s98
      %p100 = scmp.eq.s32.totalorder %s20, 0
      %p101 = por %p99, %p100
      %s103 = sadd.s32 %s102, 1
      %p106 = scmp.eq.s32.totalorder %s14, 1
      %p107 = scmp.ne.s32.totalorder %s102, %s104
      %p108 = scmp.eq.s32.totalorder %s14, 0
      %p109 = por %p107, %p108
      %p110 = scmp.ne.s32.totalorder %s102, %s104
      %p111 = scmp.eq.s32.totalorder %s19, 1
      %p112 = por %p110, %p111
      %p113 = scmp.ne.s32.totalorder %s104, %s105
      %p114 = scmp.eq.s32.totalorder %s19, 0
      %p115 = por %p113, %p114
      %p116 = scmp.ne.s32.totalorder %s104, %s105
      %p117 = scmp.eq.s32.totalorder %s20, 1
      %p118 = por %p116, %p117
      %p120 = scmp.ne.s32.totalorder %s105, %s119
      %p121 = scmp.eq.s32.totalorder %s20, 0
      %p122 = por %p120, %p121
      %s124 = sadd.s32 %s123, 1
      %p127 = scmp.eq.s32.totalorder %s14, 1
      %p128 = scmp.ne.s32.totalorder %s123, %s125
      %p129 = scmp.eq.s32.totalorder %s14, 0
      %p130 = por %p128, %p129
      %p131 = scmp.ne.s32.totalorder %s123, %s125
      %p132 = scmp.eq.s32.totalorder %s19, 1
      %p133 = por %p131, %p132
      %p134 = scmp.ne.s32.totalorder %s125, %s126
      %p135 = scmp.eq.s32.totalorder %s19, 0
      %p136 = por %p134, %p135
      %p137 = scmp.ne.s32.totalorder %s125, %s126
      %p138 = scmp.eq.s32.totalorder %s20, 1
      %p139 = por %p137, %p138
      %p141 = scmp.ne.s32.totalorder %s126, %s140
      %p142 = scmp.eq.s32.totalorder %s20, 0
      %p143 = por %p141, %p142
      %s144 = ssub.s32 %s21, %s33
      %s145 = ssub.s32 %s22, %s29
      %s146 = sor.u32 %s144, %s145
      %p147 = scmp.eq.s32.totalorder %s146, 0
      %s149 = sadd.s32 %s148, 1
      %s150 = scalar_select %p147, %s148, %s149
      %p153 = pneg %p147
      %p154 = scmp.eq.s32.totalorder %s14, 1
      %p155 = por %p153, %p154
      %p156 = scmp.ne.s32.totalorder %s148, %s151
      %p157 = scmp.eq.s32.totalorder %s14, 0
      %p158 = por %p156, %p157
      %p159 = scmp.ne.s32.totalorder %s148, %s151
      %p160 = scmp.eq.s32.totalorder %s19, 1
      %p161 = por %p159, %p160
      %p162 = scmp.ne.s32.totalorder %s151, %s152
      %p163 = scmp.eq.s32.totalorder %s19, 0
      %p164 = por %p162, %p163
      %p165 = scmp.ne.s32.totalorder %s151, %s152
      %p166 = scmp.eq.s32.totalorder %s20, 1
      %p167 = por %p165, %p166
      %p169 = scmp.ne.s32.totalorder %s152, %s168
      %p170 = scmp.eq.s32.totalorder %s20, 0
      %p171 = por %p169, %p170
      %p172 = scmp.le.s32.totalorder 1, %s14
      %p173 = scmp.lt.s32.totalorder %s14, 3
      %p174 = pnand %p172, %p173
      %p175 = pneg %p174
      // Predicated region
      $region9: #{causal_convolution_layer_forward.1} parent=5 // pred_check
        _
      $region10: #{causal_convolution_layer_forward.1} parent=5 // pred_check_branch
        %177 = sbr.rel (%p174) target = $region12
      $region11: #{causal_convolution_layer_forward.1} parent=5 // pred_region
        %s178 = ssub.s32 %s14, 1
        // Predicated region
        $region13: #{causal_convolution_layer_forward.1} parent=11 // pred_check
          %p179 = pneg %p73
        $region14: #{causal_convolution_layer_forward.1} parent=11 // pred_check_branch
          %181 = sbr.rel (%p179) target = $region16
        $region15: #{causal_convolution_layer_forward.1} parent=11 // pred_region
          _
        $region16: #{causal_convolution_layer_forward.1} parent=11 // pred_fallthru
          _
        // Predicated region
        $region17: #{causal_convolution_layer_forward.1} parent=11 // pred_check
          %p182 = pneg %p94
        $region18: #{causal_convolution_layer_forward.1} parent=11 // pred_check_branch
          %184 = sbr.rel (%p182) target = $region20
        $region19: #{causal_convolution_layer_forward.1} parent=11 // pred_region
          _
        $region20: #{causal_convolution_layer_forward.1} parent=11 // pred_fallthru
          _
        // Predicated region
        $region21: #{causal_convolution_layer_forward.1} parent=11 // pred_check
          %p185 = pneg %p115
        $region22: #{causal_convolution_layer_forward.1} parent=11 // pred_check_branch
          %187 = sbr.rel (%p185) target = $region24
        $region23: #{causal_convolution_layer_forward.1} parent=11 // pred_region
          _
        $region24: #{causal_convolution_layer_forward.1} parent=11 // pred_fallthru
          _
        // Predicated region
        $region25: #{causal_convolution_layer_forward.1} parent=11 // pred_check
          %p188 = pneg %p136
        $region26: #{causal_convolution_layer_forward.1} parent=11 // pred_check_branch
          %190 = sbr.rel (%p188) target = $region28
        $region27: #{causal_convolution_layer_forward.1} parent=11 // pred_region
          _
        $region28: #{causal_convolution_layer_forward.1} parent=11 // pred_fallthru
          _
      $region12: #{causal_convolution_layer_forward.1} parent=5 // pred_fallthru
        _
      %p191 = scmp.lt.s32.totalorder %s14, 2
      // Predicated region
      $region29: #{causal_convolution_layer_forward.1} parent=5 // pred_check
        %p192 = pneg %p191
      $region30: #{causal_convolution_layer_forward.1} parent=5 // pred_check_branch
        %194 = sbr.rel (%p192) target = $region32
      $region31: #{causal_convolution_layer_forward.1} parent=5 // pred_region
        // Predicated region
        $region33: #{causal_convolution_layer_forward.1} parent=31 // pred_check
          %p195 = pneg %p46
        $region34: #{causal_convolution_layer_forward.1} parent=31 // pred_check_branch
          %197 = sbr.rel (%p195) target = $region36
        $region35: #{causal_convolution_layer_forward.1} parent=31 // pred_region
          %p198 = scmp.lt.s32.totalorder %s21, 1
          %s199 = scalar_select %p198, %s21, 1
          %s200 = smul.addr %s199, 2
          %s201 = smul.addr %s200, 4
          %s202 = scalar_lea.vmem %s0, %s201
        $region36: #{causal_convolution_layer_forward.1} parent=31 // pred_fallthru
          _
      $region32: #{causal_convolution_layer_forward.1} parent=5 // pred_fallthru
        _
      %p203 = scmp.le.s32.totalorder 1, %s14
      %p204 = scmp.lt.s32.totalorder %s14, 3
      %p205 = pnand %p203, %p204
      %p206 = pneg %p205
      // Predicated region
      $region37: #{causal_convolution_layer_forward.1} parent=5 // pred_check
        _
      $region38: #{causal_convolution_layer_forward.1} parent=5 // pred_check_branch
        %208 = sbr.rel (%p205) target = $region40
      $region39: #{causal_convolution_layer_forward.1} parent=5 // pred_region
        %s209 = ssub.s32 %s14, 1
        %p210 = scmp.lt.s32.totalorder %s23, 1
        %s211 = scalar_select %p210, %s23, 1
        %s212 = smul.addr %s211, 2
        %s213 = smul.addr %s212, 4
        %s214 = scalar_lea.vmem %s0, %s213
        %p215 = pneg %p52
        %p216 = pneg %p49
        %p217 = pneg %p73
        %p218 = pneg %p70
        %p219 = pneg %p94
        %p220 = pneg %p91
        %p221 = pneg %p115
        %p222 = pneg %p112
        %p223 = pneg %p136
        %p224 = pneg %p133
        %p225 = pneg %p164
        %p226 = pneg %p161
        %s227 = sand.u32 %s151, 1
        %s228 = scalar_lea.sflag [#allocation3], %s227
        %s229 = sand.u32 %s151, 1
        %s230 = smul.addr %s229, 8
        %s231 = scalar_lea.vmem [#allocation2], %s230
        %p232 = scmp.lt.s32.totalorder %s23, 1
        %s233 = scalar_select %p232, %s23, 1
        %s234 = smul.addr %s233, 2
        %s235 = smul.addr %s234, 4
        %s236 = scalar_lea.vmem %s0, %s235
        %s238 = smul.u32 %s24, 8
        %s239 = sshra.s32 %s238, 3
        %s240 = sand.u32 %s238, 7
        %s241 = smul.addr %s239, 4
        %s242 = scalar_lea.vmem %s236, %s241
        %v243 = vld [vmem:[%s242] sm:$0xf]
        %v244 = vld [vmem:[%s242 + $0x4] sm:$0x1]
        %v245 = vld [vmem:[%s1] sm:$0xf]
        %v246 = vld [vmem:[%s1 + $0x4] sm:$0xf]
        %v247 = vld [vmem:[%s1 + $0x8] sm:$0xf]
        %v248 = vld [vmem:[%s1 + $0xc] sm:$0xf]
        %v249 = vld [vmem:[%s2] sm:$0xf]
        %v250 = vld [vmem:[%s2 + $0x4] sm:$0xf]
        %v251 = vld [vmem:[%s2 + $0x8] sm:$0xf]
        %v252 = vld [vmem:[%s2 + $0xc] sm:$0xf]
        %s253 = scalar_lea.vmem %s1, 16
        %v254 = vld [vmem:[%s253] sm:$0xf]
        %v255 = vld [vmem:[%s253 + $0x4] sm:$0xf]
        %v256 = vld [vmem:[%s253 + $0x8] sm:$0xf]
        %v257 = vld [vmem:[%s253 + $0xc] sm:$0xf]
        %v260 = vunpack.c.l.b16 %v243
        %v261 = vunpack.c.l.b16 %v244
        %v262 = vpack.c.b16 %v261, %v260
        %v264 = vshrl.u32 %v262, 16
        %v266 = vshll.u32 %v262, 16
        %v268 = vrot.slane %v266, 1
        %v269 = vor.u32 %v264, %v268
        %v274 = vunpack.c.l.b16 %v254
        %v275 = vunpack.c.l.b16 %v255
        %v276 = vunpack.c.l.b16 %v256
        %v277 = vunpack.c.l.b16 %v257
        %v278 = vpack.c.b16 %v275, %v274
        %v279 = vpack.c.b16 %v277, %v276
        %vm282 = vcmask 261120
        %v284 = vsel %vm282, %v269, 0
        %286 = vmatprep.subr.bf16.mxu0 0
        %287 = vmatpush1.bf16.msra.mxu0 %v278
        %288 = vmatprep.subr.bf16.mxu0 0
        %289 = vmatpush1.bf16.msra.mxu0 %v279
        %290 = vmatprep.subr.bf16.mxu0 0
        %291 = vmatpush1.bf16.msra.mxu0 0
        %292 = vmatprep.subr.bf16.mxu0 0
        %293 = vmatpush1.bf16.msra.mxu0 0
        %294 = vmatprep.subr.bf16.mxu0 0
        %295 = vmatpush1.bf16.msra.mxu0 0
        %296 = vmatprep.subr.bf16.mxu0 0
        %297 = vmatpush1.bf16.msra.mxu0 0
        %298 = vmatprep.subr.bf16.mxu0 0
        %299 = vmatpush1.bf16.msra.mxu0 0
        %300 = vmatprep.subr.bf16.mxu0 0
        %301 = vmatpush1.bf16.msra.mxu0 0
        %302 = vmatprep.subr.bf16.mxu0 0
        %303 = vmatpush1.bf16.msra.mxu0 0
        %304 = vmatprep.subr.bf16.mxu0 0
        %305 = vmatpush1.bf16.msra.mxu0 0
        %306 = vmatprep.subr.bf16.mxu0 0
        %307 = vmatpush1.bf16.msra.mxu0 0
        %308 = vmatprep.subr.bf16.mxu0 0
        %309 = vmatpush1.bf16.msra.mxu0 0
        %310 = vmatprep.subr.bf16.mxu0 0
        %311 = vmatpush1.bf16.msra.mxu0 0
        %312 = vmatprep.subr.bf16.mxu0 0
        %313 = vmatpush1.bf16.msra.mxu0 0
        %314 = vmatprep.subr.bf16.mxu0 0
        %315 = vmatpush1.bf16.msra.mxu0 0
        %316 = vmatprep.subr.bf16.mxu0 0
        %317 = vmatpush1.bf16.msra.mxu0 0
        %318 = vmatprep.mubr.bf16.mxu0 0
        %319 = vmatmul.mubr.bf16.gmra.mrb[0].mxu0 %v284
        %v320 = vpop.f32.mrb[0].mxu0
        %v321 = vadd.f32 0.0, %v320
        %v322 = vpop.f32.mrb[0].mxu0
        %v323 = vpop.f32.mrb[0].mxu0
        %v324 = vpop.f32.mrb[0].mxu0
        %325 = vdwg.mxu0
        %v330 = vunpack.c.l.b16 %v245
        %v331 = vunpack.c.l.b16 %v246
        %v332 = vunpack.c.l.b16 %v247
        %v333 = vunpack.c.l.b16 %v248
        %v334 = vpack.c.b16 %v331, %v330
        %v335 = vpack.c.b16 %v333, %v332
        %v339 = vsel %vm282, %v243, 0
        %341 = vmatprep.subr.bf16.mxu0 0
        %342 = vmatpush1.bf16.msra.mxu0 %v334
        %343 = vmatprep.subr.bf16.mxu0 0
        %344 = vmatpush1.bf16.msra.mxu0 %v335
        %345 = vmatprep.subr.bf16.mxu0 0
        %346 = vmatpush1.bf16.msra.mxu0 0
        %347 = vmatprep.subr.bf16.mxu0 0
        %348 = vmatpush1.bf16.msra.mxu0 0
        %349 = vmatprep.subr.bf16.mxu0 0
        %350 = vmatpush1.bf16.msra.mxu0 0
        %351 = vmatprep.subr.bf16.mxu0 0
        %352 = vmatpush1.bf16.msra.mxu0 0
        %353 = vmatprep.subr.bf16.mxu0 0
        %354 = vmatpush1.bf16.msra.mxu0 0
        %355 = vmatprep.subr.bf16.mxu0 0
        %356 = vmatpush1.bf16.msra.mxu0 0
        %357 = vmatprep.subr.bf16.mxu0 0
        %358 = vmatpush1.bf16.msra.mxu0 0
        %359 = vmatprep.subr.bf16.mxu0 0
        %360 = vmatpush1.bf16.msra.mxu0 0
        %361 = vmatprep.subr.bf16.mxu0 0
        %362 = vmatpush1.bf16.msra.mxu0 0
        %363 = vmatprep.subr.bf16.mxu0 0
        %364 = vmatpush1.bf16.msra.mxu0 0
        %365 = vmatprep.subr.bf16.mxu0 0
        %366 = vmatpush1.bf16.msra.mxu0 0
        %367 = vmatprep.subr.bf16.mxu0 0
        %368 = vmatpush1.bf16.msra.mxu0 0
        %369 = vmatprep.subr.bf16.mxu0 0
        %370 = vmatpush1.bf16.msra.mxu0 0
        %371 = vmatprep.subr.bf16.mxu0 0
        %372 = vmatpush1.bf16.msra.mxu0 0
        %373 = vmatprep.mubr.bf16.mxu0 0
        %374 = vmatmul.mubr.bf16.gmra.mrb[0].mxu0 %v339
        %v375 = vpop.f32.mrb[0].mxu0
        %v376 = vadd.f32 %v321, %v375
        %v377 = vpop.f32.mrb[0].mxu0
        %v378 = vpop.f32.mrb[0].mxu0
        %v379 = vpop.f32.mrb[0].mxu0
        %380 = vdwg.mxu0
        %s381 = scalar_lea.vmem %s2, 16
        %v382 = vld [vmem:[%s381] sm:$0xf]
        %v383 = vld [vmem:[%s381 + $0x4] sm:$0xf]
        %v384 = vld [vmem:[%s381 + $0x8] sm:$0xf]
        %v385 = vld [vmem:[%s381 + $0xc] sm:$0xf]
        %v390 = vunpack.c.l.b16 %v382
        %v391 = vunpack.c.l.b16 %v383
        %v392 = vunpack.c.l.b16 %v384
        %v393 = vunpack.c.l.b16 %v385
        %v394 = vpack.c.b16 %v391, %v390
        %v395 = vpack.c.b16 %v393, %v392
        %398 = vmatprep.subr.bf16.mxu0 0
        %399 = vmatpush1.bf16.msra.mxu0 %v394
        %400 = vmatprep.subr.bf16.mxu0 0
        %401 = vmatpush1.bf16.msra.mxu0 %v395
        %402 = vmatprep.subr.bf16.mxu0 0
        %403 = vmatpush1.bf16.msra.mxu0 0
        %404 = vmatprep.subr.bf16.mxu0 0
        %405 = vmatpush1.bf16.msra.mxu0 0
        %406 = vmatprep.subr.bf16.mxu0 0
        %407 = vmatpush1.bf16.msra.mxu0 0
        %408 = vmatprep.subr.bf16.mxu0 0
        %409 = vmatpush1.bf16.msra.mxu0 0
        %410 = vmatprep.subr.bf16.mxu0 0
        %411 = vmatpush1.bf16.msra.mxu0 0
        %412 = vmatprep.subr.bf16.mxu0 0
        %413 = vmatpush1.bf16.msra.mxu0 0
        %414 = vmatprep.subr.bf16.mxu0 0
        %415 = vmatpush1.bf16.msra.mxu0 0
        %416 = vmatprep.subr.bf16.mxu0 0
        %417 = vmatpush1.bf16.msra.mxu0 0
        %418 = vmatprep.subr.bf16.mxu0 0
        %419 = vmatpush1.bf16.msra.mxu0 0
        %420 = vmatprep.subr.bf16.mxu0 0
        %421 = vmatpush1.bf16.msra.mxu0 0
        %422 = vmatprep.subr.bf16.mxu0 0
        %423 = vmatpush1.bf16.msra.mxu0 0
        %424 = vmatprep.subr.bf16.mxu0 0
        %425 = vmatpush1.bf16.msra.mxu0 0
        %426 = vmatprep.subr.bf16.mxu0 0
        %427 = vmatpush1.bf16.msra.mxu0 0
        %428 = vmatprep.subr.bf16.mxu0 0
        %429 = vmatpush1.bf16.msra.mxu0 0
        %430 = vmatprep.mubr.bf16.mxu0 0
        %431 = vmatmul.mubr.bf16.gmra.mrb[0].mxu0 %v284
        %v432 = vpop.f32.mrb[0].mxu0
        %v433 = vadd.f32 0.0, %v432
        %v434 = vpop.f32.mrb[0].mxu0
        %v435 = vpop.f32.mrb[0].mxu0
        %v436 = vpop.f32.mrb[0].mxu0
        %437 = vdwg.mxu0
        %v442 = vunpack.c.l.b16 %v249
        %v443 = vunpack.c.l.b16 %v250
        %v444 = vunpack.c.l.b16 %v251
        %v445 = vunpack.c.l.b16 %v252
        %v446 = vpack.c.b16 %v443, %v442
        %v447 = vpack.c.b16 %v445, %v444
        %450 = vmatprep.subr.bf16.mxu0 0
        %451 = vmatpush1.bf16.msra.mxu0 %v446
        %452 = vmatprep.subr.bf16.mxu0 0
        %453 = vmatpush1.bf16.msra.mxu0 %v447
        %454 = vmatprep.subr.bf16.mxu0 0
        %455 = vmatpush1.bf16.msra.mxu0 0
        %456 = vmatprep.subr.bf16.mxu0 0
        %457 = vmatpush1.bf16.msra.mxu0 0
        %458 = vmatprep.subr.bf16.mxu0 0
        %459 = vmatpush1.bf16.msra.mxu0 0
        %460 = vmatprep.subr.bf16.mxu0 0
        %461 = vmatpush1.bf16.msra.mxu0 0
        %462 = vmatprep.subr.bf16.mxu0 0
        %463 = vmatpush1.bf16.msra.mxu0 0
        %464 = vmatprep.subr.bf16.mxu0 0
        %465 = vmatpush1.bf16.msra.mxu0 0
        %466 = vmatprep.subr.bf16.mxu0 0
        %467 = vmatpush1.bf16.msra.mxu0 0
        %468 = vmatprep.subr.bf16.mxu0 0
        %469 = vmatpush1.bf16.msra.mxu0 0
        %470 = vmatprep.subr.bf16.mxu0 0
        %471 = vmatpush1.bf16.msra.mxu0 0
        %472 = vmatprep.subr.bf16.mxu0 0
        %473 = vmatpush1.bf16.msra.mxu0 0
        %474 = vmatprep.subr.bf16.mxu0 0
        %475 = vmatpush1.bf16.msra.mxu0 0
        %476 = vmatprep.subr.bf16.mxu0 0
        %477 = vmatpush1.bf16.msra.mxu0 0
        %478 = vmatprep.subr.bf16.mxu0 0
        %479 = vmatpush1.bf16.msra.mxu0 0
        %480 = vmatprep.subr.bf16.mxu0 0
        %481 = vmatpush1.bf16.msra.mxu0 0
        %482 = vmatprep.mubr.bf16.mxu0 0
        %483 = vmatmul.mubr.bf16.gmra.mrb[0].mxu0 %v339
        %v484 = vpop.f32.mrb[0].mxu0
        %v485 = vadd.f32 %v433, %v484
        %v486 = vpop.f32.mrb[0].mxu0
        %v487 = vpop.f32.mrb[0].mxu0
        %v488 = vpop.f32.mrb[0].mxu0
        %489 = vdwg.mxu0
        %s490 = scalar_lea.vmem %s1, 32
        %v491 = vld [vmem:[%s490] sm:$0xf]
        %v492 = vld [vmem:[%s490 + $0x4] sm:$0xf]
        %v493 = vld [vmem:[%s490 + $0x8] sm:$0xf]
        %v494 = vld [vmem:[%s490 + $0xc] sm:$0xf]
        %v495 = vrot.slane %v262, 1
        %v500 = vunpack.c.l.b16 %v491
        %v501 = vunpack.c.l.b16 %v492
        %v502 = vunpack.c.l.b16 %v493
        %v503 = vunpack.c.l.b16 %v494
        %v504 = vpack.c.b16 %v501, %v500
        %v505 = vpack.c.b16 %v503, %v502
        %v509 = vsel %vm282, %v495, 0
        %511 = vmatprep.subr.bf16.mxu0 0
        %512 = vmatpush1.bf16.msra.mxu0 %v504
        %513 = vmatprep.subr.bf16.mxu0 0
        %514 = vmatpush1.bf16.msra.mxu0 %v505
        %515 = vmatprep.subr.bf16.mxu0 0
        %516 = vmatpush1.bf16.msra.mxu0 0
        %517 = vmatprep.subr.bf16.mxu0 0
        %518 = vmatpush1.bf16.msra.mxu0 0
        %519 = vmatprep.subr.bf16.mxu0 0
        %520 = vmatpush1.bf16.msra.mxu0 0
        %521 = vmatprep.subr.bf16.mxu0 0
        %522 = vmatpush1.bf16.msra.mxu0 0
        %523 = vmatprep.subr.bf16.mxu0 0
        %524 = vmatpush1.bf16.msra.mxu0 0
        %525 = vmatprep.subr.bf16.mxu0 0
        %526 = vmatpush1.bf16.msra.mxu0 0
        %527 = vmatprep.subr.bf16.mxu0 0
        %528 = vmatpush1.bf16.msra.mxu0 0
        %529 = vmatprep.subr.bf16.mxu0 0
        %530 = vmatpush1.bf16.msra.mxu0 0
        %531 = vmatprep.subr.bf16.mxu0 0
        %532 = vmatpush1.bf16.msra.mxu0 0
        %533 = vmatprep.subr.bf16.mxu0 0
        %534 = vmatpush1.bf16.msra.mxu0 0
        %535 = vmatprep.subr.bf16.mxu0 0
        %536 = vmatpush1.bf16.msra.mxu0 0
        %537 = vmatprep.subr.bf16.mxu0 0
        %538 = vmatpush1.bf16.msra.mxu0 0
        %539 = vmatprep.subr.bf16.mxu0 0
        %540 = vmatpush1.bf16.msra.mxu0 0
        %541 = vmatprep.subr.bf16.mxu0 0
        %542 = vmatpush1.bf16.msra.mxu0 0
        %543 = vmatprep.mubr.bf16.mxu0 0
        %544 = vmatmul.mubr.bf16.gmra.mrb[0].mxu0 %v509
        %v545 = vpop.f32.mrb[0].mxu0
        %v546 = vadd.f32 0.0, %v545
        %v547 = vpop.f32.mrb[0].mxu0
        %v548 = vpop.f32.mrb[0].mxu0
        %v549 = vpop.f32.mrb[0].mxu0
        %550 = vdwg.mxu0
        %v551 = vadd.f32 %v376, %v546
        %s552 = scalar_lea.vmem %s2, 32
        %v553 = vld [vmem:[%s552] sm:$0xf]
        %v554 = vld [vmem:[%s552 + $0x4] sm:$0xf]
        %v555 = vld [vmem:[%s552 + $0x8] sm:$0xf]
        %v556 = vld [vmem:[%s552 + $0xc] sm:$0xf]
        %v561 = vunpack.c.l.b16 %v553
        %v562 = vunpack.c.l.b16 %v554
        %v563 = vunpack.c.l.b16 %v555
        %v564 = vunpack.c.l.b16 %v556
        %v565 = vpack.c.b16 %v562, %v561
        %v566 = vpack.c.b16 %v564, %v563
        %569 = vmatprep.subr.bf16.mxu0 0
        %570 = vmatpush1.bf16.msra.mxu0 %v565
        %571 = vmatprep.subr.bf16.mxu0 0
        %572 = vmatpush1.bf16.msra.mxu0 %v566
        %573 = vmatprep.subr.bf16.mxu0 0
        %574 = vmatpush1.bf16.msra.mxu0 0
        %575 = vmatprep.subr.bf16.mxu0 0
        %576 = vmatpush1.bf16.msra.mxu0 0
        %577 = vmatprep.subr.bf16.mxu0 0
        %578 = vmatpush1.bf16.msra.mxu0 0
        %579 = vmatprep.subr.bf16.mxu0 0
        %580 = vmatpush1.bf16.msra.mxu0 0
        %581 = vmatprep.subr.bf16.mxu0 0
        %582 = vmatpush1.bf16.msra.mxu0 0
        %583 = vmatprep.subr.bf16.mxu0 0
        %584 = vmatpush1.bf16.msra.mxu0 0
        %585 = vmatprep.subr.bf16.mxu0 0
        %586 = vmatpush1.bf16.msra.mxu0 0
        %587 = vmatprep.subr.bf16.mxu0 0
        %588 = vmatpush1.bf16.msra.mxu0 0
        %589 = vmatprep.subr.bf16.mxu0 0
        %590 = vmatpush1.bf16.msra.mxu0 0
        %591 = vmatprep.subr.bf16.mxu0 0
        %592 = vmatpush1.bf16.msra.mxu0 0
        %593 = vmatprep.subr.bf16.mxu0 0
        %594 = vmatpush1.bf16.msra.mxu0 0
        %595 = vmatprep.subr.bf16.mxu0 0
        %596 = vmatpush1.bf16.msra.mxu0 0
        %597 = vmatprep.subr.bf16.mxu0 0
        %598 = vmatpush1.bf16.msra.mxu0 0
        %599 = vmatprep.subr.bf16.mxu0 0
        %600 = vmatpush1.bf16.msra.mxu0 0
        %601 = vmatprep.mubr.bf16.mxu0 0
        %602 = vmatmul.mubr.bf16.gmra.mrb[0].mxu0 %v509
        %v603 = vpop.f32.mrb[0].mxu0
        %v604 = vadd.f32 0.0, %v603
        %v605 = vpop.f32.mrb[0].mxu0
        %v606 = vpop.f32.mrb[0].mxu0
        %v607 = vpop.f32.mrb[0].mxu0
        %608 = vdwg.mxu0
        %v609 = vadd.f32 %v485, %v604
        %v610 = vld [vmem:[%s3] sm:$0x1]
        %v612 = vlaneseq
        %v613 = vshrl.u32 %v612, 7
        %v614 = vsub.s32 0, %v613
        %v615 = vrot.slane %v610, %v614
        %v617 = vadd.f32 %v551, %v615
        %v618 = vld [vmem:[%s4] sm:$0x1]
        %v620 = vlaneseq
        %v621 = vshrl.u32 %v620, 7
        %v622 = vsub.s32 0, %v621
        %v623 = vrot.slane %v618, %v622
        %v625 = vadd.f32 %v609, %v623
        %v626 = vxor.u32 %v625, 2147483648
        %v627 = vmul.f32 %v626, 1.442695
        %v628 = vpow.pop %v627
        %v629 = vadd.f32 %v628, 1.0
        %v630 = vrcp.pop %v629
        %v631 = vmul.f32 1.0, %v630
        %v632 = vmul.f32 %v617, %v631
        %633 = vst.msk [vmem:[%s231] sm:$0xff] %vm282, %v632
        %s634 = sand.u32 %s151, 1
        %s635 = scalar_lea.sflag [#allocation3], %s634
        %s636 = sand.u32 %s151, 1
        %s637 = smul.addr %s636, 8
        %s638 = scalar_lea.vmem [#allocation2], %s637
        // Predicated region
        $region41: #{causal_convolution_layer_forward.1} parent=39 // pred_check
          %p639 = pneg %p161
        $region42: #{causal_convolution_layer_forward.1} parent=39 // pred_check_branch
          %641 = sbr.rel (%p639) target = $region44
        $region43: #{causal_convolution_layer_forward.1} parent=39 // pred_region
          %s643 = ssub.s32 128, 128
          %644 = vsyncadd %s635, %s643
          %s645 = sadd.s32 %s24, %s23
          %s646 = smul.addr %s645, 128
          %s647 = scalar_lea.hbm %s5, %s646
          %s649 = sshll.u32 %s638, 4
          %s650 = int_to_ptr.vmem [resolvable:$true] %s649
          %652 = dma.vmem_to_hbm [thread:$0]  %s650, 128, %s647, %s635
        $region44: #{causal_convolution_layer_forward.1} parent=39 // pred_fallthru
          _
      $region40: #{causal_convolution_layer_forward.1} parent=5 // pred_fallthru
        _
      %p653 = scmp.le.s32.totalorder 2, %s14
      // Predicated region
      $region45: #{causal_convolution_layer_forward.1} parent=5 // pred_check
        %p654 = pneg %p653
      $region46: #{causal_convolution_layer_forward.1} parent=5 // pred_check_branch
        %656 = sbr.rel (%p654) target = $region48
      $region47: #{causal_convolution_layer_forward.1} parent=5 // pred_region
        %s657 = ssub.s32 %s14, 2
        // Predicated region
        $region49: #{causal_convolution_layer_forward.1} parent=47 // pred_check
          %p658 = pneg %p167
        $region50: #{causal_convolution_layer_forward.1} parent=47 // pred_check_branch
          %660 = sbr.rel (%p658) target = $region52
        $region51: #{causal_convolution_layer_forward.1} parent=47 // pred_region
          %s661 = sand.u32 %s152, 1
          %s662 = scalar_lea.sflag [#allocation3], %s661
          %s663 = sand.u32 %s152, 1
          %s664 = smul.addr %s663, 8
          %s665 = scalar_lea.vmem [#allocation2], %s664
          %666 = dma.done %s662, 128
        $region52: #{causal_convolution_layer_forward.1} parent=47 // pred_fallthru
          _
      $region48: #{causal_convolution_layer_forward.1} parent=5 // pred_fallthru
        _
    $region6: #{causal_convolution_layer_forward.1} parent=1 // loop_footer
      %s18 = sadd.s32 1, %s14
    $region7: #{causal_convolution_layer_forward.1} parent=1 // loop_footer_branch
      %13 = sbr.rel target = $region3
    $region8: #{causal_convolution_layer_forward.1} parent=1 // loop_exit
      _
    %667 = vsyncpa [#allocation3], 1
    %s668 = scalar_lea.sflag [#allocation3], 1
    %669 = vsyncpa %s668, 1

</llo_original>
